<compile_context>
chip_gen: v6e
topology: v6e:2x2x1
jax: 0.10.0
libtpu: 0.0.40
codegen_flags: <defaults>
</compile_context>

<pallas_src>
from typing import NamedTuple

import jax
import jax.numpy as jnp
from jax.experimental import pallas as pl
from jax.experimental.pallas import tpu as pltpu


def _round_up(x, m):
    return (x + m - 1) // m * m


def _cdiv(a, b):
    return -(-a // b)


class ProgramParams(NamedTuple):
    """Token parameters, pre-padded/cast once (hoisted out of the call path)."""
    w1: jax.Array   # (Hp, Hp) MXU dtype (bf16 by default), zero-padded
    b1: jax.Array   # (1, Hp)  f32, zero-padded
    w2: jax.Array   # (Hp, Hp)
    b2: jax.Array   # (1, Hp)


def prepare_program_params(w1, b1, w2, b2, *, param_dtype=jnp.bfloat16):
    """Pad the feature dim to a multiple of 128 and cast the MXU operands.

    Call this once per parameter set; per-call forward passes then only pad x.
    Use param_dtype=jnp.float32 for exact f32 nn.Linear numerics.
    """
    H = w1.shape[0]
    Hp = _round_up(H, 128)

    def pad_w(w):
        return jnp.zeros((Hp, Hp), param_dtype).at[:H, :H].set(w.astype(param_dtype))

    def pad_b(b):
        return jnp.zeros((1, Hp), jnp.float32).at[:, :H].set(
            b.reshape(1, -1).astype(jnp.float32))

    return ProgramParams(pad_w(w1), pad_b(b1), pad_w(w2), pad_b(b2))


def program_kernel(x_ref, w1_ref, b1_ref, w2_ref, b2_ref, o_ref):
    # token 0: Linear(H, H) — MXU matmul, f32 accumulation
    h = jnp.dot(x_ref[...], w1_ref[...], preferred_element_type=jnp.float32)
    # token 1: sin — f32 on the EUP; bias add in f32 on the VPU
    h = jnp.sin(h + b1_ref[...])
    # token 2: Linear(H, H) — cast activation back to the MXU operand dtype
    h = jnp.dot(h.astype(w2_ref.dtype), w2_ref[...],
                preferred_element_type=jnp.float32)
    # token 3: tanh — f32, then store in the output dtype
    o_ref[...] = jnp.tanh(h + b2_ref[...]).astype(o_ref.dtype)


def _select_batch_tile(B, max_batch_tile):
    """Adaptive batch tile: minimal padding, >=2 grid steps when possible."""
    Bp = _round_up(B, 8)                      # sublane-dense batch dim
    # >=2 steps lets the "parallel" axis shard across v7x's 2 TCs and lets the
    # x/out tiles double-buffer; with a single 8-row tile there is nothing to split.
    min_steps = 2 if Bp >= 16 else 1
    num_steps = max(_cdiv(Bp, max_batch_tile), min_steps)
    # For large, aligned batches this lands on TB == max_batch_tile (a multiple
    # of 256); for awkward batches it minimizes padded rows (<= 7 + one tile).
    tb = _round_up(_cdiv(Bp, num_steps), 8)
    grid_b = _cdiv(Bp, tb)
    return tb, grid_b, tb * grid_b            # (tile, grid, padded batch)


def _vmem_limit_bytes(tb, hp, param_itemsize, x_itemsize, out_itemsize):
    """Scoped VMEM derived from actual buffers, capped below physical VMEM."""
    weights = 2 * hp * hp * param_itemsize * 2   # conservative: 2 buffers each
    biases = 2 * 8 * hp * 4 * 2                  # (1,Hp) pads to an (8,Hp) tile
    x_tiles = 2 * tb * hp * x_itemsize           # double-buffered input tile
    o_tiles = 2 * tb * hp * out_itemsize         # double-buffered output tile
    scratch = 3 * tb * hp * 4                    # f32 intermediates in the body
    need = weights + biases + x_tiles + o_tiles + scratch
    try:
        cap = int(pltpu.get_tpu_info().vmem_capacity_bytes)
    except Exception:
        cap = 128 << 20
    cap = int(cap * 0.75)                        # ~48 MiB on v7x, ~96 MiB on v5e/v6e
    return max(16 << 20, min(int(need * 1.25) + (4 << 20), cap))


def program_forward(x, params: ProgramParams, *, max_batch_tile=512, out_dtype=None):
    """Apply the fused token chain to x (shape (B, H))."""
    B, H = x.shape
    Hp = params.w1.shape[0]
    assert H <= Hp, "params were prepared for a smaller hidden size than x"
    out_dtype = x.dtype if out_dtype is None else out_dtype  # bf16 halves output DMA

    x_dtype = params.w1.dtype                    # MXU operand dtype
    tb, grid_b, b_pad = _select_batch_tile(B, max_batch_tile)

    # Only x is padded per call; weights/biases were padded once in prepare().
    xp = jnp.zeros((b_pad, Hp), x_dtype).at[:B, :H].set(x.astype(x_dtype))

    out_isz = jnp.dtype(out_dtype).itemsize
    cost = pl.CostEstimate(
        flops=2 * 2 * b_pad * Hp * Hp,                       # two matmuls
        transcendentals=2 * b_pad * Hp,                      # sin + tanh
        bytes_accessed=(xp.size * xp.dtype.itemsize
                        + 2 * Hp * Hp * params.w1.dtype.itemsize
                        + 2 * Hp * 4
                        + b_pad * Hp * out_isz),
    )
    vmem_limit = _vmem_limit_bytes(tb, Hp, params.w1.dtype.itemsize,
                                   xp.dtype.itemsize, out_isz)

    # TODO(synk): for Hp beyond ~2K the two resident HpxHp weights exceed v7x's
    # 64 MiB/TC VMEM; add an N-tile grid axis for W2/out (plus K-tiling with an
    # f32 VMEM accumulator) or stream weights via pltpu.emit_pipeline, and mark
    # the resident specs pipeline_mode=pl.Buffered(1) to drop the spare copy.

    out_p = pl.pallas_call(
        program_kernel,
        out_shape=jax.ShapeDtypeStruct((b_pad, Hp), out_dtype),
        grid_spec=pltpu.PrefetchScalarGridSpec(
            num_scalar_prefetch=0,
            grid=(grid_b,),
            in_specs=[
                pl.BlockSpec((tb, Hp), lambda i: (i, 0)),   # x: tiled over batch
                pl.BlockSpec((Hp, Hp), lambda i: (0, 0)),   # W1: VMEM-resident
                pl.BlockSpec((1, Hp), lambda i: (0, 0)),    # b1: resident
                pl.BlockSpec((Hp, Hp), lambda i: (0, 0)),   # W2: resident
                pl.BlockSpec((1, Hp), lambda i: (0, 0)),    # b2: resident
            ],
            out_specs=pl.BlockSpec((tb, Hp), lambda i: (i, 0)),
        ),
        compiler_params=pltpu.CompilerParams(
            dimension_semantics=("parallel",),
            vmem_limit_bytes=vmem_limit,
        ),
        cost_estimate=cost,
    )(xp, params.w1, params.b1, params.w2, params.b2)

    # Slice away the zero padding.
    return out_p[:B, :H]


def reference_forward(x, w1, b1, w2, b2, *, param_dtype=jnp.bfloat16):
    # Plain-JAX replica of the token chain with the same operand-dtype /
    # f32-accumulate arithmetic as the kernel.
    h = jnp.dot(x.astype(param_dtype), w1.astype(param_dtype),
                preferred_element_type=jnp.float32) + b1.reshape(1, -1).astype(jnp.float32)
    h = jnp.sin(h)
    h = jnp.dot(h.astype(param_dtype), w2.astype(param_dtype),
                preferred_element_type=jnp.float32) + b2.reshape(1, -1).astype(jnp.float32)
    return jnp.tanh(h).astype(x.dtype)


if __name__ == "__main__":
    H = 32  # hidden=32 (small demo shape)

    key = jax.random.PRNGKey(0)
    kx1, kx2, kw1, kb1, kw2, kb2 = jax.random.split(key, 6)

    # Deterministic synthetic token parameters (no checkpoint loading).
    w1 = jax.random.normal(kw1, (H, H), dtype=jnp.float32) * (1.0 / jnp.sqrt(H))
    b1 = jax.random.normal(kb1, (1, H), dtype=jnp.float32) * 0.1
    w2 = jax.random.normal(kw2, (H, H), dtype=jnp.float32) * (1.0 / jnp.sqrt(H))
    b2 = jax.random.normal(kb2, (1, H), dtype=jnp.float32) * 0.1

    # Pad/cast the parameters ONCE, outside the per-call path.
    params = prepare_program_params(w1, b1, w2, b2)
    fwd = jax.jit(program_forward)

    # Exercise both the single-step grid (B=8) and a multi-step tiled grid (B=24).
    for B, kx in ((8, kx1), (24, kx2)):
        x = jax.random.normal(kx, (B, H), dtype=jnp.float32)
        out = jax.block_until_ready(fwd(x, params))
        ref = reference_forward(x, w1, b1, w2, b2)
        assert out.shape == (B, H)
        assert jnp.allclose(out, ref, atol=2e-4, rtol=2e-4), "mismatch vs reference"

    print("KERNEL_OK")
</pallas_src>

<mosaic_0001>
module attributes {stable_mosaic.version = 11 : i64} {
  func.func @program_kernel(%arg0: i32, %arg1: memref<8x128xbf16, #tpu.memory_space<vmem>>, %arg2: memref<128x128xbf16, #tpu.memory_space<vmem>>, %arg3: memref<1x128xf32, #tpu.memory_space<vmem>>, %arg4: memref<128x128xbf16, #tpu.memory_space<vmem>>, %arg5: memref<1x128xf32, #tpu.memory_space<vmem>>, %arg6: memref<8x128xf32, #tpu.memory_space<vmem>>) attributes {dimension_semantics = [#tpu.dimension_semantics<parallel>], iteration_bounds = array<i64: 1>, scalar_prefetch = 0 : i64, scratch_operands = 0 : i64, tpu.core_type = #tpu.core_type<tc>, window_params = [{transform_indices = @transform_0, window_bounds = array<i64: 8, 128>}, {pipeline_mode = #tpu.pipeline_mode<synchronous>, transform_indices = @transform_1, window_bounds = array<i64: 128, 128>}, {pipeline_mode = #tpu.pipeline_mode<synchronous>, transform_indices = @transform_2, window_bounds = array<i64: 1, 128>}, {pipeline_mode = #tpu.pipeline_mode<synchronous>, transform_indices = @transform_3, window_bounds = array<i64: 128, 128>}, {pipeline_mode = #tpu.pipeline_mode<synchronous>, transform_indices = @transform_4, window_bounds = array<i64: 1, 128>}, {transform_indices = @transform_5, window_bounds = array<i64: 8, 128>}]} {
    %c0 = arith.constant 0 : index
    %c0_0 = arith.constant 0 : index
    %0 = vector.load %arg1[%c0, %c0_0] : memref<8x128xbf16, #tpu.memory_space<vmem>>, vector<8x128xbf16>
    %c0_1 = arith.constant 0 : index
    %c0_2 = arith.constant 0 : index
    %1 = vector.load %arg2[%c0_1, %c0_2] : memref<128x128xbf16, #tpu.memory_space<vmem>>, vector<128x128xbf16>
    %cst = arith.constant dense<0.000000e+00> : vector<8x128xf32>
    %2 = tpu.matmul %0, %1, %cst {dimension_numbers = #tpu.dot_dimension_numbers<[1], [0], [0], [1], [0, 0, 1, 1], [], []>} : vector<8x128xbf16>, vector<128x128xbf16>, vector<8x128xf32> -> vector<8x128xf32>
    %c0_3 = arith.constant 0 : index
    %c0_4 = arith.constant 0 : index
    %3 = vector.load %arg3[%c0_3, %c0_4] : memref<1x128xf32, #tpu.memory_space<vmem>>, vector<1x128xf32>
    %4 = vector.broadcast %3 : vector<1x128xf32> to vector<8x128xf32>
    %5 = arith.addf %2, %4 : vector<8x128xf32>
    %6 = math.sin %5 : vector<8x128xf32>
    %7 = arith.truncf %6 : vector<8x128xf32> to vector<8x128xbf16>
    %c0_5 = arith.constant 0 : index
    %c0_6 = arith.constant 0 : index
    %8 = vector.load %arg4[%c0_5, %c0_6] : memref<128x128xbf16, #tpu.memory_space<vmem>>, vector<128x128xbf16>
    %cst_7 = arith.constant dense<0.000000e+00> : vector<8x128xf32>
    %9 = tpu.matmul %7, %8, %cst_7 {dimension_numbers = #tpu.dot_dimension_numbers<[1], [0], [0], [1], [0, 0, 1, 1], [], []>} : vector<8x128xbf16>, vector<128x128xbf16>, vector<8x128xf32> -> vector<8x128xf32>
    %c0_8 = arith.constant 0 : index
    %c0_9 = arith.constant 0 : index
    %10 = vector.load %arg5[%c0_8, %c0_9] : memref<1x128xf32, #tpu.memory_space<vmem>>, vector<1x128xf32>
    %11 = vector.broadcast %10 : vector<1x128xf32> to vector<8x128xf32>
    %12 = arith.addf %9, %11 : vector<8x128xf32>
    %13 = math.tanh %12 : vector<8x128xf32>
    %c0_10 = arith.constant 0 : index
    %c0_11 = arith.constant 0 : index
    %14 = vector.load %arg6[%c0_10, %c0_11] : memref<8x128xf32, #tpu.memory_space<vmem>>, vector<8x128xf32>
    tpu.vector_store %arg6[%c0_10, %c0_11], %13 {strides = array<i32>} : memref<8x128xf32, #tpu.memory_space<vmem>>, vector<8x128xf32>,
    return
  }
  func.func @transform_0(%arg0: i32) -> (i32, i32) {
    %c0_i32 = arith.constant 0 : i32
    %c0_i32_0 = arith.constant 0 : i32
    return %arg0, %c0_i32 : i32, i32
  }
  func.func @transform_1(%arg0: i32) -> (i32, i32) {
    %c0_i32 = arith.constant 0 : i32
    %c0_i32_0 = arith.constant 0 : i32
    %c0_i32_1 = arith.constant 0 : i32
    return %c0_i32, %c0_i32_0 : i32, i32
  }
  func.func @transform_2(%arg0: i32) -> (i32, i32) {
    %c0_i32 = arith.constant 0 : i32
    %c0_i32_0 = arith.constant 0 : i32
    %c0_i32_1 = arith.constant 0 : i32
    return %c0_i32, %c0_i32_0 : i32, i32
  }
  func.func @transform_3(%arg0: i32) -> (i32, i32) {
    %c0_i32 = arith.constant 0 : i32
    %c0_i32_0 = arith.constant 0 : i32
    %c0_i32_1 = arith.constant 0 : i32
    return %c0_i32, %c0_i32_0 : i32, i32
  }
  func.func @transform_4(%arg0: i32) -> (i32, i32) {
    %c0_i32 = arith.constant 0 : i32
    %c0_i32_0 = arith.constant 0 : i32
    %c0_i32_1 = arith.constant 0 : i32
    return %c0_i32, %c0_i32_0 : i32, i32
  }
  func.func @transform_5(%arg0: i32) -> (i32, i32) {
    %c0_i32 = arith.constant 0 : i32
    %c0_i32_0 = arith.constant 0 : i32
    return %arg0, %c0_i32 : i32, i32
  }
}

</mosaic_0001>

<llo_original>
// kernel: program_forward.1
$region0: #{program_forward.1}
  #allocation0 [shape = 'u32[]', space=smem, size = 0x4, offset = 0x4, fixed_abs, tag = 'smem constant byte address 0x4 - core index']
  #allocation1 [shape = 'u32[144,128]{1,0:T(1,128)}', space=vmem, size = 0x12000, scoped, tag = 'internal scratch']
  %s0 = inlined_call_operand.vmem [shape: bf16[8,128], index: 0, kind: input, shape index: {}]
  %s1 = inlined_call_operand.hbm [shape: bf16[128,128], index: 1, kind: input, shape index: {}]
  %s2 = inlined_call_operand.vmem [shape: f32[1,128], index: 2, kind: input, shape index: {}]
  %s3 = inlined_call_operand.hbm [shape: bf16[128,128], index: 3, kind: input, shape index: {}]
  %s4 = inlined_call_operand.vmem [shape: f32[1,128], index: 4, kind: input, shape index: {}]
  %s5 = inlined_call_operand.hbm [shape: f32[8,128], index: 5, kind: output, shape index: {}]
  %s6 = sld [smem:[#allocation0]]
  $region38: #{program_forward.1} parent=0
    _
  %s8 = ssub.s32 1, %s6
  %s9 = scalar_select 0, %s8, %s6
  $region1: #{program_forward.1} parent=0
    #allocation2 [shape = 'u8[32768]{0}', space=vmem, size = 0x8000, scoped, tag = 'input window, operand 1, single buffered']
    #allocation3 [shape = 's32[1]{0}', space=sflag, size = 0x4, scoped, tag = 'scoped memory for program_forward.1']
    #allocation4 [shape = 's32[1]{0}', space=sflag, size = 0x4, scoped, tag = 'scoped memory for program_forward.1']
    #allocation5 [shape = 'u8[32768]{0}', space=vmem, size = 0x8000, scoped, tag = 'input window, operand 3, single buffered']
    #allocation6 [shape = 's32[1]{0}', space=sflag, size = 0x4, scoped, tag = 'scoped memory for program_forward.1']
    #allocation7 [shape = 'u8[4096]{0}', space=vmem, size = 0x1000, scoped, tag = 'output window, operand 0, single buffered']
    %10 = vsyncpa [#allocation3], 0
    %11 = vsyncpa [#allocation6], 0
    %12 = vsyncpa [#allocation4], 0
    // Predicated region
    $region2: #{program_forward.1} parent=1 // pred_check
      _
    $region3: #{program_forward.1} parent=1 // pred_check_branch
      %14 = sbr.rel (0) target = $region5
    $region4: #{program_forward.1} parent=1 // pred_region
      _
    $region5: #{program_forward.1} parent=1 // pred_fallthru
      _
    // Predicated region
    $region6: #{program_forward.1} parent=1 // pred_check
      _
    $region7: #{program_forward.1} parent=1 // pred_check_branch
      %16 = sbr.rel (0) target = $region9
    $region8: #{program_forward.1} parent=1 // pred_region
      %s18 = ssub.s32 1024, 1024
      %19 = vsyncadd [#allocation3], %s18
      %s20 = sshll.u32 [#allocation2], 4
      %s21 = int_to_ptr.vmem [resolvable:$true] %s20
      %26 = dma.hbm_to_vmem [thread:$0]  %s1, 1024, %s21, [#allocation3], 64, 64, 4
    $region9: #{program_forward.1} parent=1 // pred_fallthru
      _
    // Predicated region
    $region10: #{program_forward.1} parent=1 // pred_check
      _
    $region11: #{program_forward.1} parent=1 // pred_check_branch
      %28 = sbr.rel (0) target = $region13
    $region12: #{program_forward.1} parent=1 // pred_region
      _
    $region13: #{program_forward.1} parent=1 // pred_fallthru
      _
    // Predicated region
    $region14: #{program_forward.1} parent=1 // pred_check
      _
    $region15: #{program_forward.1} parent=1 // pred_check_branch
      %30 = sbr.rel (0) target = $region17
    $region16: #{program_forward.1} parent=1 // pred_region
      %s32 = ssub.s32 1024, 1024
      %33 = vsyncadd [#allocation6], %s32
      %s34 = sshll.u32 [#allocation5], 4
      %s35 = int_to_ptr.vmem [resolvable:$true] %s34
      %40 = dma.hbm_to_vmem [thread:$0]  %s3, 1024, %s35, [#allocation6], 64, 64, 4
    $region17: #{program_forward.1} parent=1 // pred_fallthru
      _
    // Predicated region
    $region18: #{program_forward.1} parent=1 // pred_check
      _
    $region19: #{program_forward.1} parent=1 // pred_check_branch
      %42 = sbr.rel (0) target = $region21
    $region20: #{program_forward.1} parent=1 // pred_region
      _
    $region21: #{program_forward.1} parent=1 // pred_fallthru
      _
    // Predicated region
    $region22: #{program_forward.1} parent=1 // pred_check
      _
    $region23: #{program_forward.1} parent=1 // pred_check_branch
      %44 = sbr.rel (0) target = $region25
    $region24: #{program_forward.1} parent=1 // pred_region
      %45 = dma.done [#allocation3], 1024
    $region25: #{program_forward.1} parent=1 // pred_fallthru
      _
    // Predicated region
    $region26: #{program_forward.1} parent=1 // pred_check
      _
    $region27: #{program_forward.1} parent=1 // pred_check_branch
      %47 = sbr.rel (0) target = $region29
    $region28: #{program_forward.1} parent=1 // pred_region
      %48 = dma.done [#allocation6], 1024
    $region29: #{program_forward.1} parent=1 // pred_fallthru
      _
    %v50 = vld [vmem:[%s0] sm:$0xf]
    %v51 = vld [vmem:[#allocation2] sm:$0xf]
    %v52 = vld [vmem:[#allocation2 + $0x4] sm:$0xf]
    %v53 = vld [vmem:[#allocation2 + $0x8] sm:$0xf]
    %v54 = vld [vmem:[#allocation2 + $0xc] sm:$0xf]
    %v55 = vld [vmem:[#allocation2 + $0x10] sm:$0xf]
    %v56 = vld [vmem:[#allocation2 + $0x14] sm:$0xf]
    %v57 = vld [vmem:[#allocation2 + $0x18] sm:$0xf]
    %v58 = vld [vmem:[#allocation2 + $0x1c] sm:$0xf]
    %v59 = vld [vmem:[#allocation2 + $0x20] sm:$0xf]
    %v60 = vld [vmem:[#allocation2 + $0x24] sm:$0xf]
    %v61 = vld [vmem:[#allocation2 + $0x28] sm:$0xf]
    %v62 = vld [vmem:[#allocation2 + $0x2c] sm:$0xf]
    %v63 = vld [vmem:[#allocation2 + $0x30] sm:$0xf]
    %v64 = vld [vmem:[#allocation2 + $0x34] sm:$0xf]
    %v65 = vld [vmem:[#allocation2 + $0x38] sm:$0xf]
    %v66 = vld [vmem:[#allocation2 + $0x3c] sm:$0xf]
    %v67 = vld [vmem:[%s2] sm:$0x1]
    %v69 = vlaneseq
    %v70 = vshrl.u32 %v69, 7
    %v71 = vsub.s32 0, %v70
    %v72 = vrot.slane %v67, %v71
    %v90 = vunpack.c.l.b16 %v51
    %v91 = vunpack.c.l.b16 %v52
    %v92 = vunpack.c.l.b16 %v53
    %v93 = vunpack.c.l.b16 %v54
    %v94 = vunpack.c.l.b16 %v55
    %v95 = vunpack.c.l.b16 %v56
    %v96 = vunpack.c.l.b16 %v57
    %v97 = vunpack.c.l.b16 %v58
    %v98 = vunpack.c.l.b16 %v59
    %v99 = vunpack.c.l.b16 %v60
    %v100 = vunpack.c.l.b16 %v61
    %v101 = vunpack.c.l.b16 %v62
    %v102 = vunpack.c.l.b16 %v63
    %v103 = vunpack.c.l.b16 %v64
    %v104 = vunpack.c.l.b16 %v65
    %v105 = vunpack.c.l.b16 %v66
    %v106 = vpack.c.b16 %v91, %v90
    %v107 = vpack.c.b16 %v93, %v92
    %v108 = vpack.c.b16 %v95, %v94
    %v109 = vpack.c.b16 %v97, %v96
    %v110 = vpack.c.b16 %v99, %v98
    %v111 = vpack.c.b16 %v101, %v100
    %v112 = vpack.c.b16 %v103, %v102
    %v113 = vpack.c.b16 %v105, %v104
    %122 = vmatprep.subr.bf16.mxu0 0
    %123 = vmatpush1.bf16.msra.mxu0 %v113
    %124 = vmatprep.subr.bf16.mxu0 0
    %125 = vmatpush1.bf16.msra.mxu0 %v112
    %126 = vmatprep.subr.bf16.mxu0 0
    %127 = vmatpush1.bf16.msra.mxu0 %v111
    %128 = vmatprep.subr.bf16.mxu0 0
    %129 = vmatpush1.bf16.msra.mxu0 %v110
    %130 = vmatprep.subr.bf16.mxu0 0
    %131 = vmatpush1.bf16.msra.mxu0 %v109
    %132 = vmatprep.subr.bf16.mxu0 0
    %133 = vmatpush1.bf16.msra.mxu0 %v108
    %134 = vmatprep.subr.bf16.mxu0 0
    %135 = vmatpush1.bf16.msra.mxu0 %v107
    %136 = vmatprep.subr.bf16.mxu0 0
    %137 = vmatpush1.bf16.msra.mxu0 %v106
    %138 = vmatprep.subr.bf16.mxu0 0
    %139 = vmatpush2.bf16.msra.mxu0 0
    %140 = vmatprep.subr.bf16.mxu0 0
    %141 = vmatpush2.bf16.msra.mxu0 0
    %142 = vmatprep.subr.bf16.mxu0 0
    %143 = vmatpush2.bf16.msra.mxu0 0
    %144 = vmatprep.subr.bf16.mxu0 0
    %145 = vmatpush2.bf16.msra.mxu0 0
    %146 = vmatprep.subr.bf16.mxu0 0
    %147 = vmatpush2.bf16.msra.mxu0 0
    %148 = vmatprep.subr.bf16.mxu0 0
    %149 = vmatpush2.bf16.msra.mxu0 0
    %150 = vmatprep.subr.bf16.mxu0 0
    %151 = vmatpush2.bf16.msra.mxu0 0
    %152 = vmatprep.subr.bf16.mxu0 0
    %153 = vmatpush2.bf16.msra.mxu0 0
    %154 = vmatprep.mubr.bf16.mxu0 0
    %155 = vmatmul.mubr.bf16.gmra.mxu0 %v50
    %v156 = vpop.f32.mrf.mxu0
    %v157 = vadd.f32 %v72, %v156
    %v158 = vpop.f32.mrf.mxu0
    %v159 = vpop.f32.mrf.mxu0
    %v160 = vpop.f32.mrf.mxu0
    %161 = vdwg.mxu0
    %v162 = vand.u32 2147483647, %v157
    %vm163 = vcmp.le.f32.partialorder %v162, 0.7853982
    %vm164 = vcmp.lt.s32.totalorder %v157, 0
    %v165 = vand.u32 %v157, 2139095040
    %v166 = vshrl.u32 %v165, 23
    %v167 = vsub.s32 %v166, 127
    %v168 = vand.u32 2147483647, %v157
    %v169 = vand.u32 %v168, 8388607
    %v170 = vor.u32 %v169, 8388608
    %v171 = vsub.s32 0, %v170
    %v172 = vadd.s32 %v167, 1
    %vm173 = vcmp.gt.s32.totalorder %v172, 0
    %v174 = vsel %vm173, %v172, 0
    %v175 = vshrl.u32 %v174, 5
    %v176 = vand.u32 %v174, 31
    %v177 = vsub.s32 32, %v176
    %v178 = vshrl.u32 683565275, %v177
    %v179 = vshll.u32 683565275, %v176
    %v180 = vshrl.u32 2475754826, %v177
    %v181 = vor.u32 %v179, %v180
    %v182 = vshll.u32 2475754826, %v176
    %v183 = vshrl.u32 2131351028, %v177
    %v184 = vor.u32 %v182, %v183
    %v185 = vshll.u32 2131351028, %v176
    %v186 = vshrl.u32 2102212464, %v177
    %v187 = vor.u32 %v185, %v186
    %v188 = vshll.u32 2102212464, %v176
    %v189 = vshrl.u32 920167782, %v177
    %v190 = vor.u32 %v188, %v189
    %v191 = vshll.u32 920167782, %v176
    %v192 = vshrl.u32 1326507024, %v177
    %v193 = vor.u32 %v191, %v192
    %vm194 = vcmp.lt.s32.totalorder %v175, 1
    %vm195 = vcmp.lt.s32.totalorder %v175, 2
    %vm196 = vcmp.lt.s32.totalorder %v175, 3
    %vm197 = vcmp.lt.s32.totalorder %v175, 4
    %v198 = vsel %vm194, %v178, %v181
    %v199 = vsel %vm197, %v187, 2102212464
    %v200 = vsel %vm196, %v184, %v199
    %v201 = vsel %vm195, %v198, %v200
    %v202 = vsel %vm194, %v181, %v184
    %v203 = vsel %vm197, %v190, 920167782
    %v204 = vsel %vm196, %v187, %v203
    %v205 = vsel %vm195, %v202, %v204
    %v206 = vsel %vm194, %v184, %v187
    %v207 = vsel %vm197, %v193, 1326507024
    %v208 = vsel %vm196, %v190, %v207
    %v209 = vsel %vm195, %v206, %v208
    %v210 = vshll.u32 %v170, 8
    %v211 = vmul.u32.u64.compose %v210, %v209
    %v212 = vextract.low.u32 %v211
    %v213 = vextract.high.u32 %v211
    %v214 = vmul.u32.u64.compose %v210, %v205
    %v215 = vextract.low.u32 %v214
    %v216 = vextract.high.u32 %v214
    %v217 = vmul.u32 %v210, %v201
    %v218 = vadd.s32 %v213, %v215
    %vm219 = vc.u32 %v213, %v215
    %v220 = vadd.s32 %v216, 1
    %v221 = vsel %vm219, %v220, %v216
    %v222 = vadd.s32 %v217, %v221
    %v223 = vadd.s32 %v222, 536870912
    %v224 = vshrl.u32 %v223, 30
    %v225 = vshll.u32 %v224, 30
    %v226 = vsub.s32 %v222, %v225
    %vm227 = vcmp.lt.s32.totalorder %v226, 0
    %v228 = vsub.s32 0, %v226
    %v229 = vsel %vm227, %v228, %v226
    %v230 = vclz %v229
    %v231 = vsub.s32 %v230, 2
    %vm232 = vcmp.gt.s32.totalorder 0, %v231
    %v233 = vsel %vm232, 0, %v231
    %v234 = vsub.s32 32, %v233
    %v235 = vshll.u32 %v226, %v233
    %v236 = vshrl.u32 %v218, %v234
    %v237 = vor.u32 %v235, %v236
    %v238 = vsub.s32 4294967266, %v233
    %v239 = vadd.s32 %v238, 127
    %v240 = vshll.u32 %v239, 23
    %v241 = vor.u32 4788187, %v240
    %v242 = vand.u32 2147483647, %v241
    %v244 = vcvt.s32.f32 %v237
    %v245 = vmul.f32 %v244, %v242
    %v246 = vxor.u32 %v245, 2147483648
    %v247 = vsel %vm164, %v246, %v245
    %v248 = vsub.s32 4, %v224
    %v249 = vsel %vm164, %v248, %v224
    %v250 = vsel %vm163, %v157, %v247
    %v251 = vsel %vm163, 0, %v249
    %v252 = vcosq.f32.pop %v250
    %v253 = vsinq.f32.pop %v250
    %vm254 = vweird.f32 %v157
    %v255 = vadd.s32 %v251, 3
    %v256 = vand.u32 %v255, 3
    %vm257 = vcmp.lt.s32.totalorder %v256, 2
    %vm258 = vcmp.eq.s32.totalorder %v256, 0
    %v259 = vxor.u32 %v253, 2147483648
    %v260 = vsel %vm258, %v252, %v259
    %vm261 = vcmp.eq.s32.totalorder %v256, 2
    %v262 = vxor.u32 %v252, 2147483648
    %v263 = vsel %vm261, %v262, %v253
    %v264 = vsel %vm257, %v260, %v263
    %v265 = vsel %vm254, nan, %v264
    %v266 = vpack.c.bf16 %v265, %v265
    %v267 = vld [vmem:[#allocation5] sm:$0xf]
    %v268 = vld [vmem:[#allocation5 + $0x4] sm:$0xf]
    %v269 = vld [vmem:[#allocation5 + $0x8] sm:$0xf]
    %v270 = vld [vmem:[#allocation5 + $0xc] sm:$0xf]
    %v271 = vld [vmem:[#allocation5 + $0x10] sm:$0xf]
    %v272 = vld [vmem:[#allocation5 + $0x14] sm:$0xf]
    %v273 = vld [vmem:[#allocation5 + $0x18] sm:$0xf]
    %v274 = vld [vmem:[#allocation5 + $0x1c] sm:$0xf]
    %v275 = vld [vmem:[#allocation5 + $0x20] sm:$0xf]
    %v276 = vld [vmem:[#allocation5 + $0x24] sm:$0xf]
    %v277 = vld [vmem:[#allocation5 + $0x28] sm:$0xf]
    %v278 = vld [vmem:[#allocation5 + $0x2c] sm:$0xf]
    %v279 = vld [vmem:[#allocation5 + $0x30] sm:$0xf]
    %v280 = vld [vmem:[#allocation5 + $0x34] sm:$0xf]
    %v281 = vld [vmem:[#allocation5 + $0x38] sm:$0xf]
    %v282 = vld [vmem:[#allocation5 + $0x3c] sm:$0xf]
    %v283 = vld [vmem:[%s4] sm:$0x1]
    %v285 = vlaneseq
    %v286 = vshrl.u32 %v285, 7
    %v287 = vsub.s32 0, %v286
    %v288 = vrot.slane %v283, %v287
    %v306 = vunpack.c.l.b16 %v267
    %v307 = vunpack.c.l.b16 %v268
    %v308 = vunpack.c.l.b16 %v269
    %v309 = vunpack.c.l.b16 %v270
    %v310 = vunpack.c.l.b16 %v271
    %v311 = vunpack.c.l.b16 %v272
    %v312 = vunpack.c.l.b16 %v273
    %v313 = vunpack.c.l.b16 %v274
    %v314 = vunpack.c.l.b16 %v275
    %v315 = vunpack.c.l.b16 %v276
    %v316 = vunpack.c.l.b16 %v277
    %v317 = vunpack.c.l.b16 %v278
    %v318 = vunpack.c.l.b16 %v279
    %v319 = vunpack.c.l.b16 %v280
    %v320 = vunpack.c.l.b16 %v281
    %v321 = vunpack.c.l.b16 %v282
    %v322 = vpack.c.b16 %v307, %v306
    %v323 = vpack.c.b16 %v309, %v308
    %v324 = vpack.c.b16 %v311, %v310
    %v325 = vpack.c.b16 %v313, %v312
    %v326 = vpack.c.b16 %v315, %v314
    %v327 = vpack.c.b16 %v317, %v316
    %v328 = vpack.c.b16 %v319, %v318
    %v329 = vpack.c.b16 %v321, %v320
    %338 = vmatprep.subr.bf16.mxu0 0
    %339 = vmatpush1.bf16.msra.mxu0 %v329
    %340 = vmatprep.subr.bf16.mxu0 0
    %341 = vmatpush1.bf16.msra.mxu0 %v328
    %342 = vmatprep.subr.bf16.mxu0 0
    %343 = vmatpush1.bf16.msra.mxu0 %v327
    %344 = vmatprep.subr.bf16.mxu0 0
    %345 = vmatpush1.bf16.msra.mxu0 %v326
    %346 = vmatprep.subr.bf16.mxu0 0
    %347 = vmatpush1.bf16.msra.mxu0 %v325
    %348 = vmatprep.subr.bf16.mxu0 0
    %349 = vmatpush1.bf16.msra.mxu0 %v324
    %350 = vmatprep.subr.bf16.mxu0 0
    %351 = vmatpush1.bf16.msra.mxu0 %v323
    %352 = vmatprep.subr.bf16.mxu0 0
    %353 = vmatpush1.bf16.msra.mxu0 %v322
    %354 = vmatprep.subr.bf16.mxu0 0
    %355 = vmatpush2.bf16.msra.mxu0 0
    %356 = vmatprep.subr.bf16.mxu0 0
    %357 = vmatpush2.bf16.msra.mxu0 0
    %358 = vmatprep.subr.bf16.mxu0 0
    %359 = vmatpush2.bf16.msra.mxu0 0
    %360 = vmatprep.subr.bf16.mxu0 0
    %361 = vmatpush2.bf16.msra.mxu0 0
    %362 = vmatprep.subr.bf16.mxu0 0
    %363 = vmatpush2.bf16.msra.mxu0 0
    %364 = vmatprep.subr.bf16.mxu0 0
    %365 = vmatpush2.bf16.msra.mxu0 0
    %366 = vmatprep.subr.bf16.mxu0 0
    %367 = vmatpush2.bf16.msra.mxu0 0
    %368 = vmatprep.subr.bf16.mxu0 0
    %369 = vmatpush2.bf16.msra.mxu0 0
    %370 = vmatprep.mubr.bf16.mxu0 0
    %371 = vmatmul.mubr.bf16.gmra.mxu0 %v266
    %v372 = vpop.f32.mrf.mxu0
    %v373 = vadd.f32 %v288, %v372
    %v374 = vpop.f32.mrf.mxu0
    %v375 = vpop.f32.mrf.mxu0
    %v376 = vpop.f32.mrf.mxu0
    %377 = vdwg.mxu0
    %v378 = vtanh.pop %v373
    %379 = vst [vmem:[#allocation7] sm:$0xff] %v378
    // Predicated region
    $region30: #{program_forward.1} parent=1 // pred_check
      _
    $region31: #{program_forward.1} parent=1 // pred_check_branch
      %381 = sbr.rel (0) target = $region33
    $region32: #{program_forward.1} parent=1 // pred_region
      %s383 = ssub.s32 128, 128
      %384 = vsyncadd [#allocation4], %s383
      %s386 = sshll.u32 [#allocation7], 4
      %s387 = int_to_ptr.vmem [resolvable:$true] %s386
      %389 = dma.vmem_to_hbm [thread:$0]  %s387, 128, %s5, [#allocation4]
    $region33: #{program_forward.1} parent=1 // pred_fallthru
      _
    // Predicated region
    $region34: #{program_forward.1} parent=1 // pred_check
      _
    $region35: #{program_forward.1} parent=1 // pred_check_branch
      %391 = sbr.rel (0) target = $region37
    $region36: #{program_forward.1} parent=1 // pred_region
      %392 = dma.done [#allocation4], 128
    $region37: #{program_forward.1} parent=1 // pred_fallthru
      _
    %393 = vsyncpa [#allocation3], 1
    %394 = vsyncpa [#allocation6], 1
    %395 = vsyncpa [#allocation4], 1

</llo_original>
